<compile_context>
chip_gen: v5e
topology: v5e:2x2
jax: 0.10.0
libtpu: 0.0.40
codegen_flags: <defaults>
</compile_context>

<pallas_src>
import jax
import jax.numpy as jnp
from jax.experimental import pallas as pl
from jax.experimental.pallas import tpu as pltpu


def signal2spd_kernel(x_ref, o_ref):
    # x_ref block: (TB, C, T) in the input's stored dtype ; o_ref: (TB, C, C) f32
    x = x_ref[...].astype(jnp.float32)

    # center along time
    mean = jnp.mean(x, axis=-1, keepdims=True)               # (TB, C, 1)
    xc = x - mean                                             # (TB, C, T)

    # Gram matrix over T on the MXU; contracting the trailing dim needs no transpose.
    gram = jnp.einsum("bct,bdt->bcd", xc, xc,
                      preferred_element_type=jnp.float32)     # (TB, C, C)

    # cov = gram/(T-1); trace(cov) = trace(gram)/(T-1)  =>  cov/trace(cov) = gram/trace(gram)
    C = gram.shape[-1]
    row = jax.lax.broadcasted_iota(jnp.int32, (C, C), 0)
    col = jax.lax.broadcasted_iota(jnp.int32, (C, C), 1)
    diag = (row == col)[None, :, :]                           # (1, C, C)

    tra = jnp.sum(jnp.where(diag, gram, 0.0),
                  axis=(-2, -1), keepdims=True)               # (TB, 1, 1)
    inv = pl.reciprocal(tra, approx=True)                     # EUP slot
    inv = inv * (2.0 - tra * inv)                             # 1 Newton step -> ~f32 exact
    cov = gram * inv

    # add 1e-5 on the diagonal, fused (no eye materialization / extra multiply)
    cov = jnp.where(diag, cov + jnp.float32(1e-5), cov)

    o_ref[...] = cov.astype(o_ref.dtype)


def _vmem_limit_bytes():
    """Per-generation scoped-VMEM limit: ~3/4 of capacity, capped at 96 MiB."""
    cap = None
    try:
        cap = getattr(pltpu.get_tpu_info(), "vmem_capacity_bytes", None)
    except Exception:
        cap = None
    if not cap:
        cap = 64 * 1024 * 1024  # conservative fallback (v7x per-TC size)
    # -> ~96 MiB on 128-MiB parts (v5e/v6e), ~48 MiB on 64-MiB/TC parts (v7x)
    return int(min(96 * 1024 * 1024, (cap * 3) // 4))


def _pick_batch_tile(B, C, T, in_itemsize, vmem_limit, min_steps=4):
    """Batch tile TB sized against the *real* per-step VMEM working set."""
    # 2x double-buffered input block (stored dtype) + live f32 intermediates
    # (cast copy + xc ~ 2*C*T*4) + gram/cov (C*C*4) + 2x double-buffered f32 output.
    per_b = (2 * in_itemsize + 8) * C * T + 12 * C * C
    budget = (vmem_limit * 3) // 4          # headroom for compiler-internal scratch
    tb = max(1, min(B, budget // max(per_b, 1)))
    # keep the grid >= ~min_steps long: >=2 lets v7x shard over both TCs,
    # ~4 lets the double-buffered pipeline hide DMA prologue/epilogue.
    if B > 1:
        tb = min(tb, max(1, B // min(min_steps, B)))
    return tb


def signal2spd(x):
    """x: (B, 1, C, T) or (B, C, T) -> (B, C, C) float32."""
    if x.ndim == 4:
        # explicit axis: a bare squeeze() would also drop B/C/T when they equal 1
        x = jnp.squeeze(x, axis=1)
    B, C, T = x.shape

    vmem_limit = _vmem_limit_bytes()
    tb = _pick_batch_tile(B, C, T, x.dtype.itemsize, vmem_limit)

    return pl.pallas_call(
        signal2spd_kernel,
        out_shape=jax.ShapeDtypeStruct((B, C, C), jnp.float32),
        grid_spec=pltpu.PrefetchScalarGridSpec(
            num_scalar_prefetch=0,
            grid=(pl.cdiv(B, tb),),          # ragged last block OK: batches independent
            in_specs=[pl.BlockSpec((tb, C, T), lambda b: (b, 0, 0))],
            out_specs=pl.BlockSpec((tb, C, C), lambda b: (b, 0, 0)),
        ),
        compiler_params=pltpu.CompilerParams(
            # batch axis stays 'parallel' so v7x can shard it over its 2 TCs
            dimension_semantics=("parallel",),
            vmem_limit_bytes=vmem_limit,
        ),
    )(x)


def signal2spd_ref(x):
    """Pure-JAX reference mirroring the PyTorch forward."""
    if x.ndim == 4:
        x = jnp.squeeze(x, axis=1)
    x = x.astype(jnp.float32)
    mean = jnp.mean(x, axis=-1, keepdims=True)
    xc = x - mean
    cov = jnp.einsum("bct,bdt->bcd", xc, xc) / (x.shape[-1] - 1)
    tra = jnp.trace(cov, axis1=-2, axis2=-1).reshape(-1, 1, 1)
    cov = cov / tra
    eye = jnp.eye(cov.shape[-1], dtype=cov.dtype)[None]
    return cov + 1e-5 * eye


if __name__ == "__main__":
    key = jax.random.PRNGKey(0)

    ok = True
    # (11, 4, 16) exercises the ragged-last-block (cdiv) path: tb=2, grid=6.
    for (B, C, T) in [(2, 4, 16), (6, 8, 32), (11, 4, 16)]:
        key, sub = jax.random.split(key)
        x = jax.random.normal(sub, (B, 1, C, T), dtype=jnp.float32)
        out = jax.block_until_ready(signal2spd(x))
        ref = jax.block_until_ready(signal2spd_ref(x))
        ok &= (out.shape == (B, C, C))
        ok &= bool(jnp.allclose(out, ref, atol=1e-5, rtol=1e-5))

    if ok:
        print("KERNEL_OK")
</pallas_src>

<mosaic_0001>
module attributes {stable_mosaic.version = 11 : i64} {
  func.func @signal2spd_kernel(%arg0: i32, %arg1: memref<1x4x16xf32, #tpu.memory_space<vmem>>, %arg2: memref<1x4x4xf32, #tpu.memory_space<vmem>>) attributes {dimension_semantics = [#tpu.dimension_semantics<parallel>], iteration_bounds = array<i64: 2>, scalar_prefetch = 0 : i64, scratch_operands = 0 : i64, tpu.core_type = #tpu.core_type<tc>, window_params = [{transform_indices = @transform_0, window_bounds = array<i64: 1, 4, 16>}, {transform_indices = @transform_1, window_bounds = array<i64: 1, 4, 4>}]} {
    %c0 = arith.constant 0 : index
    %c0_0 = arith.constant 0 : index
    %c0_1 = arith.constant 0 : index
    %0 = vector.load %arg1[%c0, %c0_0, %c0_1] : memref<1x4x16xf32, #tpu.memory_space<vmem>>, vector<1x4x16xf32>
    %cst = arith.constant dense<0.000000e+00> : vector<1x4xf32>
    %1 = vector.multi_reduction <add>, %0, %cst [2] : vector<1x4x16xf32> to vector<1x4xf32>
    %2 = vector.shape_cast %1 : vector<1x4xf32> to vector<1x4x1xf32>
    %cst_2 = arith.constant 1.600000e+01 : f32
    %3 = vector.broadcast %cst_2 : f32 to vector<1x4x1xf32>
    %4 = arith.divf %2, %3 : vector<1x4x1xf32>
    %5 = vector.broadcast %4 : vector<1x4x1xf32> to vector<1x4x16xf32>
    %6 = arith.subf %0, %5 : vector<1x4x16xf32>
    "tpu.trace_start"() <{level = 10 : i32, message = "bct,bdt->bcd"}> : () -> ()
    %cst_3 = arith.constant dense<0.000000e+00> : vector<1x4x4xf32>
    %7 = tpu.matmul %6, %6, %cst_3 {dimension_numbers = #tpu.dot_dimension_numbers<[2], [2], [1], [1], [0, 0, 0, 1, 1, 1], [0], [0]>} : vector<1x4x16xf32>, vector<1x4x16xf32>, vector<1x4x4xf32> -> vector<1x4x4xf32>
    "tpu.trace_stop"() : () -> ()
    %8 = tpu.iota {dimensions = array<i32: 0>} : vector<4x4xi32>
    %9 = tpu.iota {dimensions = array<i32: 1>} : vector<4x4xi32>
    %10 = arith.cmpi eq, %8, %9 : vector<4x4xi32>
    %11 = vector.shape_cast %10 : vector<4x4xi1> to vector<1x4x4xi1>
    %cst_4 = arith.constant 0.000000e+00 : f32
    %12 = vector.broadcast %cst_4 : f32 to vector<1x4x4xf32>
    %13 = arith.select %11, %7, %12 : vector<1x4x4xi1>, vector<1x4x4xf32>
    %cst_5 = arith.constant dense<0.000000e+00> : vector<1xf32>
    %14 = vector.multi_reduction <add>, %13, %cst_5 [1, 2] : vector<1x4x4xf32> to vector<1xf32>
    %15 = vector.shape_cast %14 : vector<1xf32> to vector<1x1x1xf32>
    %16 = tpu.reciprocal %15 {approx = true} : vector<1x1x1xf32> -> vector<1x1x1xf32>
    %17 = arith.mulf %15, %16 : vector<1x1x1xf32>
    %cst_6 = arith.constant 2.000000e+00 : f32
    %18 = vector.broadcast %cst_6 : f32 to vector<1x1x1xf32>
    %19 = arith.subf %18, %17 : vector<1x1x1xf32>
    %20 = arith.mulf %16, %19 : vector<1x1x1xf32>
    %21 = vector.broadcast %20 : vector<1x1x1xf32> to vector<1x4x4xf32>
    %22 = arith.mulf %7, %21 : vector<1x4x4xf32>
    %cst_7 = arith.constant 9.99999974E-6 : f32
    %23 = vector.broadcast %cst_7 : f32 to vector<1x4x4xf32>
    %24 = arith.addf %22, %23 : vector<1x4x4xf32>
    %25 = arith.select %11, %24, %22 : vector<1x4x4xi1>, vector<1x4x4xf32>
    %c0_8 = arith.constant 0 : index
    %c0_9 = arith.constant 0 : index
    %c0_10 = arith.constant 0 : index
    %26 = vector.load %arg2[%c0_8, %c0_9, %c0_10] : memref<1x4x4xf32, #tpu.memory_space<vmem>>, vector<1x4x4xf32>
    tpu.vector_store %arg2[%c0_8, %c0_9, %c0_10], %25 {strides = array<i32>} : memref<1x4x4xf32, #tpu.memory_space<vmem>>, vector<1x4x4xf32>,
    return
  }
  func.func @transform_0(%arg0: i32) -> (i32, i32, i32) {
    %c0_i32 = arith.constant 0 : i32
    %c0_i32_0 = arith.constant 0 : i32
    %c0_i32_1 = arith.constant 0 : i32
    return %arg0, %c0_i32, %c0_i32_0 : i32, i32, i32
  }
  func.func @transform_1(%arg0: i32) -> (i32, i32, i32) {
    %c0_i32 = arith.constant 0 : i32
    %c0_i32_0 = arith.constant 0 : i32
    %c0_i32_1 = arith.constant 0 : i32
    return %arg0, %c0_i32, %c0_i32_0 : i32, i32, i32
  }
}

</mosaic_0001>

<llo_original>
// kernel: tpu_custom_call.1
$region0: #{tpu_custom_call.1}
  #allocation0 [shape = 'u32[]', space=smem, size = 0x4, offset = 0x4, fixed_abs, tag = 'smem constant byte address 0x4 - core index']
  #allocation1 [shape = 'u32[72,128]{1,0:T(1,128)}', space=vmem, size = 0x9000, scoped, tag = 'internal scratch']
  %s0 = inlined_call_operand.hbm [shape: f32[2,4,16], index: 0, kind: input, shape index: {}]
  %s1 = inlined_call_operand.hbm [shape: f32[2,4,4], index: 1, kind: output, shape index: {}]
  %s2 = sld [smem:[#allocation0]]
  $region41: #{tpu_custom_call.1} parent=0
    _
  %s4 = ssub.s32 1, %s2
  %s5 = scalar_select 0, %s4, %s2
  $region1: #{tpu_custom_call.1} parent=0
    #allocation2 [shape = 'u8[4096]{0}', space=vmem, size = 0x1000, scoped, tag = 'input window, operand 0']
    #allocation3 [shape = 's32[2]{0}', space=sflag, size = 0x8, scoped, tag = 'scoped memory for tpu_custom_call.1']
    #allocation4 [shape = 's32[2]{0}', space=sflag, size = 0x8, scoped, tag = 'scoped memory for tpu_custom_call.1']
    #allocation5 [shape = 'u8[4096]{0}', space=vmem, size = 0x1000, scoped, tag = 'output window, operand 0']
    %6 = vsyncpa [#allocation3], 0
    %s7 = scalar_lea.sflag [#allocation3], 1
    %8 = vsyncpa %s7, 0
    %9 = vsyncpa [#allocation4], 0
    %s10 = scalar_lea.sflag [#allocation4], 1
    %11 = vsyncpa %s10, 0
    loop: start=0, step=1, limit=4
    $region2: #{tpu_custom_call.1} parent=1 // loop_pre_header
      _
    $region3: #{tpu_custom_call.1} parent=1 // loop_header
      %s13 = sphi 0, %s17
      %p14 = scmp.ge.s32.totalorder %s13, 4
      %s23 = sphi 0, %s25
      %s26 = sphi 0, %s23
      %s27 = sphi 0, %s26
      %s43 = sphi 0, %s27
      %s49 = sphi 0, %s51
      %s52 = sphi 0, %s49
      %s53 = sphi 0, %s52
      %s69 = sphi 0, %s53
    $region4: #{tpu_custom_call.1} parent=1 // loop_header_branch
      %16 = sbr.rel (%p14) target = $region8
    $region5: #{tpu_custom_call.1} parent=1 // loop_body
      %s18 = ssub.s32 %s13, 1
      %s19 = ssub.s32 %s13, 2
      %s20 = sadd.s32 %s13, 1
      %s21 = ssub.s32 %s13, %s20
      %p22 = scmp.eq.s32.totalorder %s21, 0
      %s24 = sadd.s32 %s23, 1
      %s25 = scalar_select %p22, %s23, %s24
      %p28 = pneg %p22
      %p29 = scmp.eq.s32.totalorder %s13, 1
      %p30 = por %p28, %p29
      %p31 = scmp.ne.s32.totalorder %s23, %s26
      %p32 = scmp.eq.s32.totalorder %s13, 0
      %p33 = por %p31, %p32
      %p34 = scmp.ne.s32.totalorder %s23, %s26
      %p35 = scmp.eq.s32.totalorder %s18, 1
      %p36 = por %p34, %p35
      %p37 = scmp.ne.s32.totalorder %s26, %s27
      %p38 = scmp.eq.s32.totalorder %s18, 0
      %p39 = por %p37, %p38
      %p40 = scmp.ne.s32.totalorder %s26, %s27
      %p41 = scmp.eq.s32.totalorder %s19, 1
      %p42 = por %p40, %p41
      %p44 = scmp.ne.s32.totalorder %s27, %s43
      %p45 = scmp.eq.s32.totalorder %s19, 0
      %p46 = por %p44, %p45
      %s47 = ssub.s32 %s13, %s20
      %p48 = scmp.eq.s32.totalorder %s47, 0
      %s50 = sadd.s32 %s49, 1
      %s51 = scalar_select %p48, %s49, %s50
      %p54 = pneg %p48
      %p55 = scmp.eq.s32.totalorder %s13, 1
      %p56 = por %p54, %p55
      %p57 = scmp.ne.s32.totalorder %s49, %s52
      %p58 = scmp.eq.s32.totalorder %s13, 0
      %p59 = por %p57, %p58
      %p60 = scmp.ne.s32.totalorder %s49, %s52
      %p61 = scmp.eq.s32.totalorder %s18, 1
      %p62 = por %p60, %p61
      %p63 = scmp.ne.s32.totalorder %s52, %s53
      %p64 = scmp.eq.s32.totalorder %s18, 0
      %p65 = por %p63, %p64
      %p66 = scmp.ne.s32.totalorder %s52, %s53
      %p67 = scmp.eq.s32.totalorder %s19, 1
      %p68 = por %p66, %p67
      %p70 = scmp.ne.s32.totalorder %s53, %s69
      %p71 = scmp.eq.s32.totalorder %s19, 0
      %p72 = por %p70, %p71
      %p73 = scmp.le.s32.totalorder 1, %s13
      %p74 = scmp.lt.s32.totalorder %s13, 3
      %p75 = pnand %p73, %p74
      %p76 = pneg %p75
      // Predicated region
      $region9: #{tpu_custom_call.1} parent=5 // pred_check
        _
      $region10: #{tpu_custom_call.1} parent=5 // pred_check_branch
        %78 = sbr.rel (%p75) target = $region12
      $region11: #{tpu_custom_call.1} parent=5 // pred_region
        %s79 = ssub.s32 %s13, 1
      $region12: #{tpu_custom_call.1} parent=5 // pred_fallthru
        _
      %p80 = scmp.lt.s32.totalorder %s13, 2
      // Predicated region
      $region13: #{tpu_custom_call.1} parent=5 // pred_check
        %p81 = pneg %p80
      $region14: #{tpu_custom_call.1} parent=5 // pred_check_branch
        %83 = sbr.rel (%p81) target = $region16
      $region15: #{tpu_custom_call.1} parent=5 // pred_region
        // Predicated region
        $region17: #{tpu_custom_call.1} parent=15 // pred_check
          %p84 = pneg %p33
        $region18: #{tpu_custom_call.1} parent=15 // pred_check_branch
          %86 = sbr.rel (%p84) target = $region20
        $region19: #{tpu_custom_call.1} parent=15 // pred_region
          %s87 = sand.u32 %s23, 1
          %s88 = scalar_lea.sflag [#allocation3], %s87
          %s89 = sand.u32 %s23, 1
          %s90 = smul.addr %s89, 4
          %s91 = scalar_lea.vmem [#allocation2], %s90
          %93 = vsyncadd %s88, 0
          %s94 = smul.addr %s13, 4
          %s95 = scalar_lea.hbm %s0, %s94
          %s97 = sshll.u32 %s95, 4
          %s98 = int_to_ptr.hbm [resolvable:$true] %s97
          %s99 = sshll.u32 %s91, 4
          %s100 = int_to_ptr.vmem [resolvable:$true] %s99
          %102 = dma.hbm_to_vmem [thread:$0]  %s98, 64, %s100, %s88
        $region20: #{tpu_custom_call.1} parent=15 // pred_fallthru
          _
      $region16: #{tpu_custom_call.1} parent=5 // pred_fallthru
        _
      %p103 = scmp.le.s32.totalorder 1, %s13
      %p104 = scmp.lt.s32.totalorder %s13, 3
      %p105 = pnand %p103, %p104
      %p106 = pneg %p105
      // Predicated region
      $region21: #{tpu_custom_call.1} parent=5 // pred_check
        _
      $region22: #{tpu_custom_call.1} parent=5 // pred_check_branch
        %108 = sbr.rel (%p105) target = $region24
      $region23: #{tpu_custom_call.1} parent=5 // pred_region
        %s109 = ssub.s32 %s13, 1
        %s110 = sand.u32 %s26, 1
        %s111 = scalar_lea.sflag [#allocation3], %s110
        %s112 = sand.u32 %s26, 1
        %s113 = smul.addr %s112, 4
        %s114 = scalar_lea.vmem [#allocation2], %s113
        // Predicated region
        $region25: #{tpu_custom_call.1} parent=23 // pred_check
          %p115 = pneg %p39
        $region26: #{tpu_custom_call.1} parent=23 // pred_check_branch
          %117 = sbr.rel (%p115) target = $region28
        $region27: #{tpu_custom_call.1} parent=23 // pred_region
          %119 = dma.done %s111, 64
        $region28: #{tpu_custom_call.1} parent=23 // pred_fallthru
          _
        %s120 = sand.u32 %s26, 1
        %s121 = scalar_lea.sflag [#allocation3], %s120
        %s122 = sand.u32 %s26, 1
        %s123 = smul.addr %s122, 4
        %s124 = scalar_lea.vmem [#allocation2], %s123
        %p125 = pneg %p39
        %p126 = pneg %p36
        %p127 = pneg %p65
        %p128 = pneg %p62
        %s129 = sand.u32 %s52, 1
        %s130 = scalar_lea.sflag [#allocation4], %s129
        %s131 = sand.u32 %s52, 1
        %s132 = smul.addr %s131, 4
        %s133 = scalar_lea.vmem [#allocation5], %s132
        %v134 = vld [vmem:[%s114] sm:$0xf]
        %vm135 = vcmask 125952
        %v136 = vsel %vm135, %v134, 0.0
        %137 = vadd.xlane.f32.xlu0 %v136
        %v138 = vpop.xlane.xlu0 %137
        %v139 = vrcp.pop 16.0
        %v140 = vmul.f32 16.0, %v139
        %v141 = vsub.f32 1.0, %v140
        %v142 = vmul.f32 %v139, %v141
        %v143 = vadd.f32 %v139, %v142
        %vm144 = vweird.f32 %v139
        %v145 = vsel %vm144, %v139, %v143
        %v146 = vmul.f32 %v138, %v145
        %v147 = vsub.f32 %v134, %v146
        %vm148 = vcmask 130048
        %v150 = vsel %vm148, %v147, 0
        %152 = vmatpush.xpose.msra.mxu0 0.0
        %153 = vmatpush.xpose.msra.mxu0 0.0
        %154 = vmatpush.xpose.msra.mxu0 0.0
        %155 = vmatpush.xpose.msra.mxu0 0.0
        %156 = vmatpush.xpose.msra.mxu0 0.0
        %157 = vmatpush.xpose.msra.mxu0 0.0
        %158 = vmatpush.xpose.msra.mxu0 0.0
        %159 = vmatpush.xpose.msra.mxu0 0.0
        %160 = vmatpush.xpose.msra.mxu0 0.0
        %161 = vmatpush.xpose.msra.mxu0 0.0
        %162 = vmatpush.xpose.msra.mxu0 0.0
        %163 = vmatpush.xpose.msra.mxu0 0.0
        %164 = vmatpush.xpose.msra.mxu0 0.0
        %165 = vmatpush.xpose.msra.mxu0 0.0
        %166 = vmatpush.xpose.msra.mxu0 0.0
        %167 = vmatpush.xpose.msra.mxu0 %v150
        %168 = vmatmul.f32.gmra.mxu0 %v150
        %v169 = vpop.f32.mrf.mxu0
        %v170 = vadd.f32 0.0, %v169
        %171 = vdwg.mxu0
        %v172 = vlaneseq
        %v173 = vshrl.u32 %v172, 7
        %v174 = vlaneseq
        %v175 = vand.u32 %v174, 127
        %vm176 = vcmp.eq.s32.totalorder %v173, %v175
        %v177 = vsel %vm176, %v170, 0.0
        %vm178 = vcmask 27648
        %v179 = vsel %vm178, %v177, 0.0
        %180 = vadd.xlane.f32.xlu0 %v179
        %v181 = vpop.xlane.xlu0 %180
        %v182 = vrot.slane %v181, 4
        %v183 = vadd.f32 %v181, %v182
        %v184 = vrot.slane %v183, 2
        %v185 = vadd.f32 %v183, %v184
        %v186 = vrot.slane %v185, 1
        %v187 = vadd.f32 %v185, %v186
        %v188 = vrcp.pop %v187
        %v189 = vmul.f32 %v187, %v188
        %v190 = vsub.f32 2.0, %v189
        %v191 = vmul.f32 %v188, %v190
        %v192 = vmul.f32 %v170, %v191
        %v193 = vadd.f32 %v192, 1e-05
        %v194 = vsel %vm176, %v193, %v192
        %195 = vst.msk [vmem:[%s133] sm:$0xf] %vm178, %v194
        %s196 = sand.u32 %s52, 1
        %s197 = scalar_lea.sflag [#allocation4], %s196
        %s198 = sand.u32 %s52, 1
        %s199 = smul.addr %s198, 4
        %s200 = scalar_lea.vmem [#allocation5], %s199
        // Predicated region
        $region29: #{tpu_custom_call.1} parent=23 // pred_check
          %p201 = pneg %p62
        $region30: #{tpu_custom_call.1} parent=23 // pred_check_branch
          %203 = sbr.rel (%p201) target = $region32
        $region31: #{tpu_custom_call.1} parent=23 // pred_region
          %205 = vsyncadd %s197, 0
          %s206 = smul.addr %s18, 4
          %s207 = scalar_lea.hbm %s1, %s206
          %s209 = sshll.u32 %s200, 4
          %s210 = int_to_ptr.vmem [resolvable:$true] %s209
          %s211 = sshll.u32 %s207, 4
          %s212 = int_to_ptr.hbm [resolvable:$true] %s211
          %214 = dma.vmem_to_hbm [thread:$0]  %s210, 64, %s212, %s197
        $region32: #{tpu_custom_call.1} parent=23 // pred_fallthru
          _
      $region24: #{tpu_custom_call.1} parent=5 // pred_fallthru
        _
      %p215 = scmp.le.s32.totalorder 2, %s13
      // Predicated region
      $region33: #{tpu_custom_call.1} parent=5 // pred_check
        %p216 = pneg %p215
      $region34: #{tpu_custom_call.1} parent=5 // pred_check_branch
        %218 = sbr.rel (%p216) target = $region36
      $region35: #{tpu_custom_call.1} parent=5 // pred_region
        %s219 = ssub.s32 %s13, 2
        // Predicated region
        $region37: #{tpu_custom_call.1} parent=35 // pred_check
          %p220 = pneg %p68
        $region38: #{tpu_custom_call.1} parent=35 // pred_check_branch
          %222 = sbr.rel (%p220) target = $region40
        $region39: #{tpu_custom_call.1} parent=35 // pred_region
          %s223 = sand.u32 %s53, 1
          %s224 = scalar_lea.sflag [#allocation4], %s223
          %s225 = sand.u32 %s53, 1
          %s226 = smul.addr %s225, 4
          %s227 = scalar_lea.vmem [#allocation5], %s226
          %229 = dma.done %s224, 64
        $region40: #{tpu_custom_call.1} parent=35 // pred_fallthru
          _
      $region36: #{tpu_custom_call.1} parent=5 // pred_fallthru
        _
    $region6: #{tpu_custom_call.1} parent=1 // loop_footer
      %s17 = sadd.s32 1, %s13
    $region7: #{tpu_custom_call.1} parent=1 // loop_footer_branch
      %12 = sbr.rel target = $region3
    $region8: #{tpu_custom_call.1} parent=1 // loop_exit
      _
    %230 = vsyncpa [#allocation3], 1
    %s231 = scalar_lea.sflag [#allocation3], 1
    %232 = vsyncpa %s231, 1
    %233 = vsyncpa [#allocation4], 1
    %s234 = scalar_lea.sflag [#allocation4], 1
    %235 = vsyncpa %s234, 1

</llo_original>
